<compile_context>
chip_gen: v7x
topology: tpu7x:2x2x1
jax: 0.10.0
libtpu: 0.0.40
codegen_flags: <defaults>
</compile_context>

<pallas_src>
import jax
import jax.numpy as jnp
import numpy as np
from jax.experimental import pallas as pl
from jax.experimental.pallas import tpu as pltpu


_LANE = 128
_SUBLANE = 8
_TARGET_BLOCK_BYTES = 4 * 1024 * 1024   # ~4 MiB per (R_tile, TS) input block
_VMEM_LIMIT_BYTES = 48 * 1024 * 1024    # > v5e's 16 MiB default, < v7x's 64 MiB physical


def _round_up(x, m):
    return (x + m - 1) // m * m


def _oa_kernel(xp_ref, xt_ref, wmap_ref, alpha_ref, beta_ref, out_ref, acc_ref):
    s = pl.program_id(1)

    @pl.when(s == 0)
    def _():
        acc_ref[...] = jnp.zeros_like(acc_ref)

    # Hot path: squared difference + lane reduction on this (R_tile, TS) block.
    # Inputs arrive in their native dtype; the upcast is free under the DMA.
    d = xp_ref[...].astype(jnp.float32) - xt_ref[...].astype(jnp.float32)
    acc_ref[...] += jnp.sum(d * d, axis=-1, keepdims=True)        # (R_tile, 1)

    @pl.when(s == pl.num_programs(1) - 1)
    def _():
        # wmap is block-diagonal (W.sum(axis=1) / S) per batch: one tiny matmul
        # performs mean-scaling, channel mixing and the sum over branches.
        total = jnp.dot(wmap_ref[...], acc_ref[...],
                        preferred_element_type=jnp.float32)        # (B_tile, 1)
        out_ref[...] = total * alpha_ref[...] + beta_ref[...]      # (B_tile, NB)


def oa_forward(x_pred, x_true, W, bias, alpha):
    """W: (C, NB) stacked branch weights (column i = branch_i.weight);
    bias: (NB,) branch biases; alpha: (NB,) mixing weights (`self.weights`)."""
    B, C = x_pred.shape[0], x_pred.shape[1]
    S = int(np.prod(x_pred.shape[2:]))
    NB = int(alpha.shape[0])
    R = B * C

    # ---- row (batch) tiling: only when it introduces no padding waste ----------
    if B >= 16 and B % 8 == 0:
        B_tile = 8                       # >= 2 row tiles -> v7x megacore can split them
    else:
        B_tile = B                       # single row tile; full-dim block is always legal
    n_row_tiles = B // B_tile
    R_tile = B_tile * C

    # ---- lane (spatial) tiling: largest multiple of 128 within the VMEM budget -
    itemsize = np.dtype(x_pred.dtype).itemsize
    r_vmem = _round_up(R_tile, _SUBLANE)                 # sublane padding in VMEM
    max_ts = max(_LANE, (_TARGET_BLOCK_BYTES // (r_vmem * itemsize)) // _LANE * _LANE)
    TS = int(min(max_ts, _round_up(S, _LANE)))
    S_pad = _round_up(S, TS)
    n_s_tiles = S_pad // TS

    # ---- flatten to sublane-dense (R, S); zero-pad S (padded lanes add 0) ------
    xp2 = x_pred.reshape(R, S)
    xt2 = x_true.reshape(R, S)
    if S_pad != S:
        xp2 = jnp.pad(xp2, ((0, 0), (0, S_pad - S)))
        xt2 = jnp.pad(xt2, ((0, 0), (0, S_pad - S)))

    # ---- tiny epilogue parameters ----------------------------------------------
    w_sum = W.astype(jnp.float32).sum(axis=1)                          # (C,)
    inv_s = jnp.float32(1.0 / S)
    # (B_tile, R_tile) block-diagonal: wmap[b, b*C + c] = w_sum[c] / S
    wmap = jnp.kron(jnp.eye(B_tile, dtype=jnp.float32), (w_sum * inv_s)[None, :])
    alpha2 = alpha.reshape(1, NB).astype(jnp.float32)
    beta2 = jnp.sum(bias.astype(jnp.float32)) * alpha2                 # (1, NB)

    out = pl.pallas_call(
        _oa_kernel,
        out_shape=jax.ShapeDtypeStruct((B, NB), jnp.float32),
        grid_spec=pltpu.PrefetchScalarGridSpec(
            num_scalar_prefetch=0,
            grid=(n_row_tiles, n_s_tiles),
            in_specs=[
                pl.BlockSpec((R_tile, TS), lambda r, s: (r, s)),
                pl.BlockSpec((R_tile, TS), lambda r, s: (r, s)),
                pl.BlockSpec((B_tile, R_tile), lambda r, s: (0, 0)),
                pl.BlockSpec((1, NB), lambda r, s: (0, 0)),
                pl.BlockSpec((1, NB), lambda r, s: (0, 0)),
            ],
            out_specs=pl.BlockSpec((B_tile, NB), lambda r, s: (r, 0)),
            scratch_shapes=[pltpu.VMEM((R_tile, 1), jnp.float32)],
        ),
        compiler_params=pltpu.CompilerParams(
            dimension_semantics=("parallel", "arbitrary"),
            vmem_limit_bytes=_VMEM_LIMIT_BYTES,
        ),
    )(xp2, xt2, wmap, alpha2, beta2)

    # PyTorch's .squeeze() on the (B, NB) result.
    return jnp.squeeze(out)


def oa_reference(x_pred, x_true, W, bias, alpha):
    """Pure-JAX reference mirroring the PyTorch forward (incl. its broadcast)."""
    B, C = x_pred.shape[0], x_pred.shape[1]
    diff = (x_pred - x_true) ** 2
    dm = diff.reshape(B, C, -1).mean(axis=-1)                    # (B, C)
    br = dm @ W + bias                                           # (B, NB)
    ws = (br[:, :, None] * alpha[None, None, :]).sum(axis=1)     # (B, NB)
    return jnp.squeeze(ws)


if __name__ == "__main__":
    # Small shapes consistent with the module: 5D (B, C, D1, D2, D3), in_channels=C.
    B, C, D1, D2, D3 = 2, 4, 4, 8, 8
    NB = 3

    key = jax.random.PRNGKey(0)
    k1, k2, k3, k4 = jax.random.split(key, 4)

    x_pred = jax.random.normal(k1, (B, C, D1, D2, D3), dtype=jnp.float32)
    x_true = jax.random.normal(k2, (B, C, D1, D2, D3), dtype=jnp.float32)

    # Deterministic parameter init (synthetic; shapes match nn.Linear(C, 1) x NB).
    W = 0.1 * jax.random.normal(k3, (C, NB), dtype=jnp.float32)    # column i = branch_i.weight
    bias = 0.1 * jax.random.normal(k4, (NB,), dtype=jnp.float32)   # branch_i.bias
    alpha = jnp.ones((NB,), dtype=jnp.float32) / NB                # self.weights init

    out = oa_forward(x_pred, x_true, W, bias, alpha)
    out = jax.block_until_ready(out)

    ref = oa_reference(x_pred, x_true, W, bias, alpha)
    np.testing.assert_allclose(np.asarray(out), np.asarray(ref), rtol=1e-5, atol=1e-5)

    print("KERNEL_OK")
</pallas_src>

<mosaic_0001>
module attributes {stable_mosaic.version = 11 : i64} {
  func.func @_oa_kernel(%arg0: i32, %arg1: i32, %arg2: memref<8x256xf32, #tpu.memory_space<vmem>>, %arg3: memref<8x256xf32, #tpu.memory_space<vmem>>, %arg4: memref<2x8xf32, #tpu.memory_space<vmem>>, %arg5: memref<1x3xf32, #tpu.memory_space<vmem>>, %arg6: memref<1x3xf32, #tpu.memory_space<vmem>>, %arg7: memref<2x3xf32, #tpu.memory_space<vmem>>, %arg8: memref<8x1xf32, #tpu.memory_space<vmem>>) attributes {dimension_semantics = [#tpu.dimension_semantics<parallel>, #tpu.dimension_semantics<arbitrary>], iteration_bounds = array<i64: 1, 1>, scalar_prefetch = 0 : i64, scratch_operands = 1 : i64, tpu.core_type = #tpu.core_type<tc>, window_params = [{transform_indices = @transform_0, window_bounds = array<i64: 8, 256>}, {transform_indices = @transform_1, window_bounds = array<i64: 8, 256>}, {pipeline_mode = #tpu.pipeline_mode<synchronous>, transform_indices = @transform_2, window_bounds = array<i64: 2, 8>}, {pipeline_mode = #tpu.pipeline_mode<synchronous>, transform_indices = @transform_3, window_bounds = array<i64: 1, 3>}, {pipeline_mode = #tpu.pipeline_mode<synchronous>, transform_indices = @transform_4, window_bounds = array<i64: 1, 3>}, {transform_indices = @transform_5, window_bounds = array<i64: 2, 3>}]} {
    %c0_i32 = arith.constant 0 : i32
    %0 = arith.cmpi eq, %arg1, %c0_i32 : i32
    %1 = arith.extui %0 : i1 to i32
    %c0_i32_0 = arith.constant 0 : i32
    %2 = arith.cmpi ne, %1, %c0_i32_0 : i32
    scf.if %2 {
      %cst_10 = arith.constant 0.000000e+00 : f32
      %15 = vector.broadcast %cst_10 : f32 to vector<8x1xf32>
      %c0_11 = arith.constant 0 : index
      %c0_12 = arith.constant 0 : index
      %16 = vector.load %arg8[%c0_11, %c0_12] : memref<8x1xf32, #tpu.memory_space<vmem>>, vector<8x1xf32>
      tpu.vector_store %arg8[%c0_11, %c0_12], %15 {strides = array<i32>} : memref<8x1xf32, #tpu.memory_space<vmem>>, vector<8x1xf32>,
    } else {
    }
    %c0 = arith.constant 0 : index
    %c0_1 = arith.constant 0 : index
    %3 = vector.load %arg2[%c0, %c0_1] : memref<8x256xf32, #tpu.memory_space<vmem>>, vector<8x256xf32>
    %c0_2 = arith.constant 0 : index
    %c0_3 = arith.constant 0 : index
    %4 = vector.load %arg3[%c0_2, %c0_3] : memref<8x256xf32, #tpu.memory_space<vmem>>, vector<8x256xf32>
    %5 = arith.subf %3, %4 : vector<8x256xf32>
    %c0_4 = arith.constant 0 : index
    %c0_5 = arith.constant 0 : index
    %6 = vector.load %arg8[%c0_4, %c0_5] : memref<8x1xf32, #tpu.memory_space<vmem>>, vector<8x1xf32>
    %7 = arith.mulf %5, %5 : vector<8x256xf32>
    %cst = arith.constant dense<0.000000e+00> : vector<8xf32>
    %8 = vector.multi_reduction <add>, %7, %cst [1] : vector<8x256xf32> to vector<8xf32>
    %9 = vector.shape_cast %8 : vector<8xf32> to vector<8x1xf32>
    %10 = arith.addf %6, %9 : vector<8x1xf32>
    %c0_6 = arith.constant 0 : index
    %c0_7 = arith.constant 0 : index
    %11 = vector.load %arg8[%c0_6, %c0_7] : memref<8x1xf32, #tpu.memory_space<vmem>>, vector<8x1xf32>
    tpu.vector_store %arg8[%c0_6, %c0_7], %10 {strides = array<i32>} : memref<8x1xf32, #tpu.memory_space<vmem>>, vector<8x1xf32>,
    %c0_i32_8 = arith.constant 0 : i32
    %12 = arith.cmpi eq, %arg1, %c0_i32_8 : i32
    %13 = arith.extui %12 : i1 to i32
    %c0_i32_9 = arith.constant 0 : i32
    %14 = arith.cmpi ne, %13, %c0_i32_9 : i32
    scf.if %14 {
      %c0_10 = arith.constant 0 : index
      %c0_11 = arith.constant 0 : index
      %15 = vector.load %arg4[%c0_10, %c0_11] : memref<2x8xf32, #tpu.memory_space<vmem>>, vector<2x8xf32>
      %c0_12 = arith.constant 0 : index
      %c0_13 = arith.constant 0 : index
      %16 = vector.load %arg8[%c0_12, %c0_13] : memref<8x1xf32, #tpu.memory_space<vmem>>, vector<8x1xf32>
      %cst_14 = arith.constant dense<0.000000e+00> : vector<2x1xf32>
      %17 = tpu.matmul %15, %16, %cst_14 {dimension_numbers = #tpu.dot_dimension_numbers<[1], [0], [0], [1], [0, 0, 1, 1], [], []>} : vector<2x8xf32>, vector<8x1xf32>, vector<2x1xf32> -> vector<2x1xf32>
      %c0_15 = arith.constant 0 : index
      %c0_16 = arith.constant 0 : index
      %18 = vector.load %arg5[%c0_15, %c0_16] : memref<1x3xf32, #tpu.memory_space<vmem>>, vector<1x3xf32>
      %19 = vector.broadcast %17 : vector<2x1xf32> to vector<2x3xf32>
      %20 = vector.broadcast %18 : vector<1x3xf32> to vector<2x3xf32>
      %21 = arith.mulf %19, %20 : vector<2x3xf32>
      %c0_17 = arith.constant 0 : index
      %c0_18 = arith.constant 0 : index
      %22 = vector.load %arg6[%c0_17, %c0_18] : memref<1x3xf32, #tpu.memory_space<vmem>>, vector<1x3xf32>
      %23 = vector.broadcast %22 : vector<1x3xf32> to vector<2x3xf32>
      %24 = arith.addf %21, %23 : vector<2x3xf32>
      %c0_19 = arith.constant 0 : index
      %c0_20 = arith.constant 0 : index
      %25 = vector.load %arg7[%c0_19, %c0_20] : memref<2x3xf32, #tpu.memory_space<vmem>>, vector<2x3xf32>
      tpu.vector_store %arg7[%c0_19, %c0_20], %24 {strides = array<i32>} : memref<2x3xf32, #tpu.memory_space<vmem>>, vector<2x3xf32>,
    } else {
    }
    return
  }
  func.func @transform_0(%arg0: i32, %arg1: i32) -> (i32, i32) {
    %c0_i32 = arith.constant 0 : i32
    return %arg0, %arg1 : i32, i32
  }
  func.func @transform_1(%arg0: i32, %arg1: i32) -> (i32, i32) {
    %c0_i32 = arith.constant 0 : i32
    return %arg0, %arg1 : i32, i32
  }
  func.func @transform_2(%arg0: i32, %arg1: i32) -> (i32, i32) {
    %c0_i32 = arith.constant 0 : i32
    %c0_i32_0 = arith.constant 0 : i32
    %c0_i32_1 = arith.constant 0 : i32
    return %c0_i32, %c0_i32_0 : i32, i32
  }
  func.func @transform_3(%arg0: i32, %arg1: i32) -> (i32, i32) {
    %c0_i32 = arith.constant 0 : i32
    %c0_i32_0 = arith.constant 0 : i32
    %c0_i32_1 = arith.constant 0 : i32
    return %c0_i32, %c0_i32_0 : i32, i32
  }
  func.func @transform_4(%arg0: i32, %arg1: i32) -> (i32, i32) {
    %c0_i32 = arith.constant 0 : i32
    %c0_i32_0 = arith.constant 0 : i32
    %c0_i32_1 = arith.constant 0 : i32
    return %c0_i32, %c0_i32_0 : i32, i32
  }
  func.func @transform_5(%arg0: i32, %arg1: i32) -> (i32, i32) {
    %c0_i32 = arith.constant 0 : i32
    %c0_i32_0 = arith.constant 0 : i32
    return %arg0, %c0_i32 : i32, i32
  }
}

</mosaic_0001>

<llo_original>
// kernel: tpu_custom_call.1
$region0: #{tpu_custom_call.1}
  #allocation0 [shape = 'u32[]', space=smem, size = 0x4, offset = 0x4, fixed_abs, tag = 'smem constant byte address 0x4 - core index']
  #allocation1 [shape = 'u32[144,128]{1,0:T(1,128)}', space=vmem, size = 0x12000, scoped, tag = 'internal scratch']
  #allocation2 [shape = 'f32[8,1]{1,0:T(8,128)}', space=vmem, size = 0x1000, scoped, tag = 'scratch operand']
  %s0 = inlined_call_operand.hbm [shape: f32[8,256], index: 0, kind: input, shape index: {}]
  %s1 = inlined_call_operand.hbm [shape: f32[8,256], index: 1, kind: input, shape index: {}]
  %s2 = inlined_call_operand.vmem [shape: f32[2,8], index: 2, kind: input, shape index: {}]
  %s3 = inlined_call_operand.vmem [shape: f32[1,3], index: 3, kind: input, shape index: {}]
  %s4 = inlined_call_operand.vmem [shape: f32[1,3], index: 4, kind: input, shape index: {}]
  %s5 = inlined_call_operand.hbm [shape: f32[2,3], index: 5, kind: output, shape index: {}]
  %s6 = sld [smem:[#allocation0]]
  $region46: #{tpu_custom_call.1} parent=0
    _
  %s8 = ssub.s32 1, %s6
  %s9 = scalar_select 0, %s8, %s6
  $region1: #{tpu_custom_call.1} parent=0
    #allocation3 [shape = 'u8[8192]{0}', space=vmem, size = 0x2000, scoped, tag = 'input window, operand 0, single buffered']
    #allocation4 [shape = 's32[1]{0}', space=sflag, size = 0x4, scoped, tag = 'scoped memory for tpu_custom_call.1']
    #allocation5 [shape = 's32[1]{0}', space=sflag, size = 0x4, scoped, tag = 'scoped memory for tpu_custom_call.1']
    #allocation6 [shape = 'u8[8192]{0}', space=vmem, size = 0x2000, scoped, tag = 'input window, operand 1, single buffered']
    #allocation7 [shape = 's32[1]{0}', space=sflag, size = 0x4, scoped, tag = 'scoped memory for tpu_custom_call.1']
    #allocation8 [shape = 'u8[1024]{0}', space=vmem, size = 0x400, scoped, tag = 'output window, operand 0, single buffered']
    %10 = vsyncpa [#allocation4], 0
    %11 = vsyncpa [#allocation7], 0
    %12 = vsyncpa [#allocation5], 0
    // Predicated region
    $region2: #{tpu_custom_call.1} parent=1 // pred_check
      _
    $region3: #{tpu_custom_call.1} parent=1 // pred_check_branch
      %14 = sbr.rel (0) target = $region5
    $region4: #{tpu_custom_call.1} parent=1 // pred_region
      %s16 = ssub.s32 256, 256
      %17 = vsyncadd [#allocation4], %s16
      %s19 = sshll.u32 [#allocation3], 4
      %s20 = int_to_ptr.vmem [resolvable:$true] %s19
      %22 = dma.hbm_to_vmem [thread:$0]  %s0, 256, %s20, [#allocation4]
    $region5: #{tpu_custom_call.1} parent=1 // pred_fallthru
      _
    // Predicated region
    $region6: #{tpu_custom_call.1} parent=1 // pred_check
      _
    $region7: #{tpu_custom_call.1} parent=1 // pred_check_branch
      %24 = sbr.rel (0) target = $region9
    $region8: #{tpu_custom_call.1} parent=1 // pred_region
      %s26 = ssub.s32 256, 256
      %27 = vsyncadd [#allocation7], %s26
      %s29 = sshll.u32 [#allocation6], 4
      %s30 = int_to_ptr.vmem [resolvable:$true] %s29
      %32 = dma.hbm_to_vmem [thread:$0]  %s1, 256, %s30, [#allocation7]
    $region9: #{tpu_custom_call.1} parent=1 // pred_fallthru
      _
    // Predicated region
    $region10: #{tpu_custom_call.1} parent=1 // pred_check
      _
    $region11: #{tpu_custom_call.1} parent=1 // pred_check_branch
      %34 = sbr.rel (0) target = $region13
    $region12: #{tpu_custom_call.1} parent=1 // pred_region
      _
    $region13: #{tpu_custom_call.1} parent=1 // pred_fallthru
      _
    // Predicated region
    $region14: #{tpu_custom_call.1} parent=1 // pred_check
      _
    $region15: #{tpu_custom_call.1} parent=1 // pred_check_branch
      %36 = sbr.rel (0) target = $region17
    $region16: #{tpu_custom_call.1} parent=1 // pred_region
      _
    $region17: #{tpu_custom_call.1} parent=1 // pred_fallthru
      _
    // Predicated region
    $region18: #{tpu_custom_call.1} parent=1 // pred_check
      _
    $region19: #{tpu_custom_call.1} parent=1 // pred_check_branch
      %38 = sbr.rel (0) target = $region21
    $region20: #{tpu_custom_call.1} parent=1 // pred_region
      _
    $region21: #{tpu_custom_call.1} parent=1 // pred_fallthru
      _
    // Predicated region
    $region22: #{tpu_custom_call.1} parent=1 // pred_check
      _
    $region23: #{tpu_custom_call.1} parent=1 // pred_check_branch
      %40 = sbr.rel (0) target = $region25
    $region24: #{tpu_custom_call.1} parent=1 // pred_region
      %41 = dma.done [#allocation4], 256
    $region25: #{tpu_custom_call.1} parent=1 // pred_fallthru
      _
    // Predicated region
    $region26: #{tpu_custom_call.1} parent=1 // pred_check
      _
    $region27: #{tpu_custom_call.1} parent=1 // pred_check_branch
      %43 = sbr.rel (0) target = $region29
    $region28: #{tpu_custom_call.1} parent=1 // pred_region
      %44 = dma.done [#allocation7], 256
    $region29: #{tpu_custom_call.1} parent=1 // pred_fallthru
      _
    %p45 = scmp.eq.s32.totalorder 0, 0
    // Predicated region
    $region30: #{tpu_custom_call.1} parent=1 // pred_check
      %p46 = pneg %p45
    $region31: #{tpu_custom_call.1} parent=1 // pred_check_branch
      %48 = sbr.rel (%p46) target = $region33
    $region32: #{tpu_custom_call.1} parent=1 // pred_region
      %vm49 = vcmask 7168
      %50 = vst.msk [vmem:[#allocation2] sm:$0xff] %vm49, 0.0
    $region33: #{tpu_custom_call.1} parent=1 // pred_fallthru
      _
    %v51 = vld [vmem:[#allocation3] sm:$0xff]
    %v52 = vld [vmem:[#allocation3 + $0x8] sm:$0xff]
    %v53 = vld [vmem:[#allocation6] sm:$0xff]
    %v54 = vld [vmem:[#allocation6 + $0x8] sm:$0xff]
    %v55 = vsub.f32 %v51, %v53
    %v56 = vsub.f32 %v52, %v54
    %v57 = vld [vmem:[#allocation2] sm:$0xff]
    %v58 = vmul.f32 %v55, %v55
    %v59 = vmul.f32 %v56, %v56
    %v60 = vadd.f32 %v58, %v59
    %61 = vadd.xlane.f32.xlu0 %v60
    %v62 = vpop.xlane.xlu0 %61
    %v63 = vadd.f32 %v57, %v62
    %vm64 = vcmask 7168
    %65 = vst.msk [vmem:[#allocation2] sm:$0xff] %vm64, %v63
    // Predicated region
    $region34: #{tpu_custom_call.1} parent=1 // pred_check
      %p66 = pneg %p45
    $region35: #{tpu_custom_call.1} parent=1 // pred_check_branch
      %68 = sbr.rel (%p66) target = $region37
    $region36: #{tpu_custom_call.1} parent=1 // pred_region
      %v69 = vld [vmem:[%s2] sm:$0x3]
      %v70 = vld [vmem:[#allocation2] sm:$0xff]
      %vm71 = vcmask 64512
      %v73 = vsel %vm71, %v69, 0
      %75 = vmatprep.subr.mxu0 0.0
      %76 = vmatpush1.msra.mxu0 %v70
      %77 = vmatprep.subr.mxu0 0.0
      %78 = vmatpush1.msra.mxu0 0.0
      %79 = vmatprep.subr.mxu0 0.0
      %80 = vmatpush1.msra.mxu0 0.0
      %81 = vmatprep.subr.mxu0 0.0
      %82 = vmatpush1.msra.mxu0 0.0
      %83 = vmatprep.subr.mxu0 0.0
      %84 = vmatpush1.msra.mxu0 0.0
      %85 = vmatprep.subr.mxu0 0.0
      %86 = vmatpush1.msra.mxu0 0.0
      %87 = vmatprep.subr.mxu0 0.0
      %88 = vmatpush1.msra.mxu0 0.0
      %89 = vmatprep.subr.mxu0 0.0
      %90 = vmatpush1.msra.mxu0 0.0
      %91 = vmatprep.subr.mxu0 0.0
      %92 = vmatpush1.msra.mxu0 0.0
      %93 = vmatprep.subr.mxu0 0.0
      %94 = vmatpush1.msra.mxu0 0.0
      %95 = vmatprep.subr.mxu0 0.0
      %96 = vmatpush1.msra.mxu0 0.0
      %97 = vmatprep.subr.mxu0 0.0
      %98 = vmatpush1.msra.mxu0 0.0
      %99 = vmatprep.subr.mxu0 0.0
      %100 = vmatpush1.msra.mxu0 0.0
      %101 = vmatprep.subr.mxu0 0.0
      %102 = vmatpush1.msra.mxu0 0.0
      %103 = vmatprep.subr.mxu0 0.0
      %104 = vmatpush1.msra.mxu0 0.0
      %105 = vmatprep.subr.mxu0 0.0
      %106 = vmatpush1.msra.mxu0 0.0
      %107 = vmatprep.subr.mxu0 0.0
      %108 = vmatpush1.msra.mxu0 0.0
      %109 = vmatprep.subr.mxu0 0.0
      %110 = vmatpush1.msra.mxu0 0.0
      %111 = vmatprep.subr.mxu0 0.0
      %112 = vmatpush1.msra.mxu0 0.0
      %113 = vmatprep.subr.mxu0 0.0
      %114 = vmatpush1.msra.mxu0 0.0
      %115 = vmatprep.subr.mxu0 0.0
      %116 = vmatpush1.msra.mxu0 0.0
      %117 = vmatprep.subr.mxu0 0.0
      %118 = vmatpush1.msra.mxu0 0.0
      %119 = vmatprep.subr.mxu0 0.0
      %120 = vmatpush1.msra.mxu0 0.0
      %121 = vmatprep.subr.mxu0 0.0
      %122 = vmatpush1.msra.mxu0 0.0
      %123 = vmatprep.subr.mxu0 0.0
      %124 = vmatpush1.msra.mxu0 0.0
      %125 = vmatprep.subr.mxu0 0.0
      %126 = vmatpush1.msra.mxu0 0.0
      %127 = vmatprep.subr.mxu0 0.0
      %128 = vmatpush1.msra.mxu0 0.0
      %129 = vmatprep.subr.mxu0 0.0
      %130 = vmatpush1.msra.mxu0 0.0
      %131 = vmatprep.subr.mxu0 0.0
      %132 = vmatpush1.msra.mxu0 0.0
      %133 = vmatprep.subr.mxu0 0.0
      %134 = vmatpush1.msra.mxu0 0.0
      %135 = vmatprep.subr.mxu0 0.0
      %136 = vmatpush1.msra.mxu0 0.0
      %137 = vmatprep.subr.mxu0 0.0
      %138 = vmatpush1.msra.mxu0 0.0
      %139 = vmatprep.mubr.f32.mxu0 0.0
      %140 = vmatmul.mubr.f32.gmra.mrb[0].mxu0 %v73
      %v141 = vpop.f32.mrb[0].mxu0
      %v142 = vadd.f32 0.0, %v141
      %v143 = vpop.f32.mrb[0].mxu0
      %144 = vdwg.mxu0
      %v145 = vld [vmem:[%s3] sm:$0x1]
      %147 = vset.pattern.permute.xlu0 0
      %148 = vperm.xlu0 %147, %v142
      %v149 = vpop.permute.xlu0 %148
      %v152 = vlaneseq
      %v153 = vshrl.u32 %v152, 7
      %v154 = vsub.s32 0, %v153
      %v155 = vrot.slane %v145, %v154
      %v157 = vmul.f32 %v149, %v155
      %v158 = vld [vmem:[%s4] sm:$0x1]
      %v160 = vlaneseq
      %v161 = vshrl.u32 %v160, 7
      %v162 = vsub.s32 0, %v161
      %v163 = vrot.slane %v158, %v162
      %v165 = vadd.f32 %v157, %v163
      %vm166 = vcmask 17408
      %167 = vst.msk [vmem:[#allocation8] sm:$0x3] %vm166, %v165
    $region37: #{tpu_custom_call.1} parent=1 // pred_fallthru
      _
    // Predicated region
    $region38: #{tpu_custom_call.1} parent=1 // pred_check
      _
    $region39: #{tpu_custom_call.1} parent=1 // pred_check_branch
      %169 = sbr.rel (0) target = $region41
    $region40: #{tpu_custom_call.1} parent=1 // pred_region
      %s171 = ssub.s32 32, 32
      %172 = vsyncadd [#allocation5], %s171
      %s174 = sshll.u32 [#allocation8], 4
      %s175 = int_to_ptr.vmem [resolvable:$true] %s174
      %177 = dma.vmem_to_hbm [thread:$0]  %s175, 32, %s5, [#allocation5]
    $region41: #{tpu_custom_call.1} parent=1 // pred_fallthru
      _
    // Predicated region
    $region42: #{tpu_custom_call.1} parent=1 // pred_check
      _
    $region43: #{tpu_custom_call.1} parent=1 // pred_check_branch
      %179 = sbr.rel (0) target = $region45
    $region44: #{tpu_custom_call.1} parent=1 // pred_region
      %180 = dma.done [#allocation5], 32
    $region45: #{tpu_custom_call.1} parent=1 // pred_fallthru
      _
    %181 = vsyncpa [#allocation4], 1
    %182 = vsyncpa [#allocation7], 1
    %183 = vsyncpa [#allocation5], 1

</llo_original>
